<compile_context>
chip_gen: v5e
topology: v5e:2x2
jax: 0.10.0
libtpu: 0.0.40
codegen_flags: <defaults>
</compile_context>

<pallas_src>
import functools

import jax
import jax.numpy as jnp
from jax.experimental import pallas as pl
from jax.experimental.pallas import tpu as pltpu


def _round_up(x, m):
    return ((x + m - 1) // m) * m


# ----------------------------- Pallas kernel --------------------------------
def stid_kernel(num_layer,
                x_ref, w0_ref, b0_ref,
                w1_ref, b1_ref, w2_ref, b2_ref,
                wr_ref, br_ref,
                out_ref):
    # fused: time_series_emb_layer (1x1 conv == matmul) + identity pass-through
    # of node / time-of-day / day-of-week embeddings (torch.cat folded into W0).
    x = x_ref[...]
    h = jnp.dot(x, w0_ref[...], preferred_element_type=jnp.float32) + b0_ref[...]

    # encoder: num_layer x (Conv1x1 -> ReLU -> Dropout -> Conv1x1 + residual)
    def layer(w1, b1, w2, b2, h):
        h1 = jnp.maximum(
            jnp.dot(h.astype(w1.dtype), w1, preferred_element_type=jnp.float32) + b1,
            0.0)
        # TODO(synk): dropout omitted (identity at inference / eval mode)
        return jnp.dot(h1.astype(w2.dtype), w2,
                       preferred_element_type=jnp.float32) + b2 + h

    if num_layer > 4:
        # deep encoders: visible loop bounds live ranges / code size
        def body(l, h):
            return layer(w1_ref[l], b1_ref[l], w2_ref[l], b2_ref[l], h)
        h = jax.lax.fori_loop(0, num_layer, body, h, unroll=True)
    else:
        for l in range(num_layer):
            h = layer(w1_ref[l], b1_ref[l], w2_ref[l], b2_ref[l], h)

    # regression_layer: Conv2d(hidden_dim -> output_len, 1x1); output block is
    # unpadded (tile, OUT) so the HBM writeback carries only useful bytes.
    wr = wr_ref[...]
    out_ref[...] = (jnp.dot(h.astype(wr.dtype), wr, preferred_element_type=jnp.float32)
                    + br_ref[...]).astype(out_ref.dtype)


# ------------------------------- wrapper -------------------------------------
def stid_forward(history_data, params, cfg, *, token_tile=2048, compute_dtype=None):
    if compute_dtype is None:
        # bf16 MXU operands (f32 accumulation) are supported on all current TPUs.
        compute_dtype = jnp.bfloat16

    B, L, N, C = history_data.shape
    assert L == cfg["input_len"]
    Cin = cfg["input_dim"]
    Lin = L * Cin
    E = cfg["embed_dim"]
    ND = cfg["node_dim"]
    TD = cfg["temp_dim_tid"]
    DD = cfg["temp_dim_diw"]
    H = E + ND + TD + DD
    H_pad = _round_up(H, 128)          # lane-dense hidden width (zero padding)
    OUT = cfg["output_len"]
    NL = cfg["num_layer"]
    F = Lin + ND + TD + DD

    # ---- glue: embedding gathers + one lane-contiguous token feature matrix ----
    # input_data: [B,L,N,Cin] -> [B,N,L,Cin] -> [B,N,L*Cin]  (matches torch
    # transpose(1,2).view(B,N,-1); feature order t0c0,t0c1,...,t1c0,...)
    x = history_data[..., :Cin]
    ts_feat = jnp.transpose(x, (0, 2, 1, 3)).reshape(B * N, Lin)

    node_feat = jnp.broadcast_to(params["node_emb"][None], (B, N, ND)).reshape(B * N, ND)

    tid_idx = (history_data[:, -1, :, 1] % cfg["time_of_day_size"]).astype(jnp.int32)
    tid_feat = params["tid_emb"][tid_idx].reshape(B * N, TD)

    d = history_data[..., 2]
    d = d - d.min()
    d = d / (d.max() + 1e-8)
    diw_idx = jnp.clip((d[:, -1, :] * cfg["day_of_week_size"]).astype(jnp.int32),
                       0, cfg["day_of_week_size"] - 1)
    diw_feat = params["diw_emb"][diw_idx].reshape(B * N, DD)

    fused = jnp.concatenate([ts_feat, node_feat, tid_feat, diw_feat], axis=-1)  # [tokens, F]

    # fold emb conv + channel concat into one block matmul; pad hidden to H_pad
    side = ND + TD + DD
    W0 = jnp.zeros((F, H_pad), jnp.float32)
    W0 = W0.at[:Lin, :E].set(params["W_ts"])
    W0 = W0.at[Lin:, E:E + side].set(jnp.eye(side, dtype=jnp.float32))
    b0 = jnp.zeros((1, H_pad), jnp.float32).at[:, :E].set(params["b_ts"])

    # encoder weights padded to 128x128 (zero rows/cols keep residual math exact);
    # biases stored as (NL, 1, H_pad) so b_ref[l] is a 2-D row inside the kernel.
    W1 = jnp.zeros((NL, H_pad, H_pad), jnp.float32).at[:, :H, :H].set(params["W1"])
    b1 = jnp.zeros((NL, 1, H_pad), jnp.float32).at[:, 0, :H].set(params["b1"])
    W2 = jnp.zeros((NL, H_pad, H_pad), jnp.float32).at[:, :H, :H].set(params["W2"])
    b2 = jnp.zeros((NL, 1, H_pad), jnp.float32).at[:, 0, :H].set(params["b2"])

    # regression weights: zero-pad rows to H_pad; columns stay at OUT (unpadded
    # output -> minimal HBM writeback bytes).
    W_r = jnp.zeros((H_pad, OUT), jnp.float32).at[:H, :].set(params["W_r"])
    b_r = params["b_r"]                                   # (1, OUT)

    # token tiling: big tiles, but always >= 2 grid steps when possible so a v7x
    # chip can shard the parallel axis across both TensorCores.
    tokens = B * N
    tile = min(token_tile, _round_up(max((tokens + 1) // 2, 1), 8))
    padded = _round_up(tokens, tile)
    if padded > tokens:
        fused = jnp.pad(fused, ((0, padded - tokens), (0, 0)))

    # bf16 (default) MXU operands; accumulation & bias/residual stay f32
    fused_c = fused.astype(compute_dtype)
    W0_c = W0.astype(compute_dtype)
    W1_c = W1.astype(compute_dtype)
    W2_c = W2.astype(compute_dtype)
    Wr_c = W_r.astype(compute_dtype)

    grid = (padded // tile,)
    kernel = functools.partial(stid_kernel, NL)

    out_flat = pl.pallas_call(
        kernel,
        out_shape=jax.ShapeDtypeStruct((padded, OUT), jnp.float32),
        grid_spec=pltpu.PrefetchScalarGridSpec(
            num_scalar_prefetch=0,
            grid=grid,
            in_specs=[
                pl.BlockSpec((tile, F), lambda i: (i, 0)),
                # constant index maps -> weights stay VMEM-resident across steps
                # (NOTE: left default-buffered; pl.Buffered(1) only matters if
                #  H/num_layer scale up on v7x's 64 MiB VMEM)
                pl.BlockSpec((F, H_pad), lambda i: (0, 0)),
                pl.BlockSpec((1, H_pad), lambda i: (0, 0)),
                pl.BlockSpec((NL, H_pad, H_pad), lambda i: (0, 0, 0)),
                pl.BlockSpec((NL, 1, H_pad), lambda i: (0, 0, 0)),
                pl.BlockSpec((NL, H_pad, H_pad), lambda i: (0, 0, 0)),
                pl.BlockSpec((NL, 1, H_pad), lambda i: (0, 0, 0)),
                pl.BlockSpec((H_pad, OUT), lambda i: (0, 0)),
                pl.BlockSpec((1, OUT), lambda i: (0, 0)),
            ],
            out_specs=pl.BlockSpec((tile, OUT), lambda i: (i, 0)),
        ),
        compiler_params=pltpu.CompilerParams(
            dimension_semantics=("parallel",),
            vmem_limit_bytes=32 * 1024 * 1024,
            # let XLA fuse the transpose/gather/concat producer of `fused`
            # into the pallas_call input (skips one HBM round trip)
            allow_input_fusion=[True] + [False] * 8,
        ),
    )(
        fused_c, W0_c, b0,
        W1_c, b1, W2_c, b2,
        Wr_c, b_r,
    )

    # [padded, OUT] -> [B, output_len, N, 1]  (PyTorch NCHW output)
    pred = out_flat[:tokens, :].reshape(B, N, OUT).transpose(0, 2, 1)[..., None]
    return pred


# --------------------------- plain-JAX reference ------------------------------
def stid_reference(history_data, params, cfg):
    B, L, N, C = history_data.shape
    Cin = cfg["input_dim"]
    x = history_data[..., :Cin]
    ts_feat = jnp.transpose(x, (0, 2, 1, 3)).reshape(B * N, L * Cin)
    node_feat = jnp.broadcast_to(params["node_emb"][None],
                                 (B, N, cfg["node_dim"])).reshape(B * N, -1)
    tid_idx = (history_data[:, -1, :, 1] % cfg["time_of_day_size"]).astype(jnp.int32)
    tid_feat = params["tid_emb"][tid_idx].reshape(B * N, -1)
    d = history_data[..., 2]
    d = d - d.min()
    d = d / (d.max() + 1e-8)
    diw_idx = jnp.clip((d[:, -1, :] * cfg["day_of_week_size"]).astype(jnp.int32),
                       0, cfg["day_of_week_size"] - 1)
    diw_feat = params["diw_emb"][diw_idx].reshape(B * N, -1)

    emb = ts_feat @ params["W_ts"] + params["b_ts"]
    h = jnp.concatenate([emb, node_feat, tid_feat, diw_feat], axis=-1)
    for l in range(cfg["num_layer"]):
        h1 = jnp.maximum(h @ params["W1"][l] + params["b1"][l], 0.0)
        h = h1 @ params["W2"][l] + params["b2"][l] + h
    out = h @ params["W_r"] + params["b_r"]
    return out.reshape(B, N, cfg["output_len"]).transpose(0, 2, 1)[..., None]


# ------------------------------ param init ------------------------------------
def xavier(key, shape):
    fan_in, fan_out = shape[-2], shape[-1]
    bound = (6.0 / (fan_in + fan_out)) ** 0.5
    return jax.random.uniform(key, shape, jnp.float32, -bound, bound)


def init_params(key, cfg):
    Lin = cfg["input_len"] * cfg["input_dim"]
    H = cfg["hidden_dim"]
    NL = cfg["num_layer"]
    ks = jax.random.split(key, 12)
    return {
        "node_emb": xavier(ks[0], (cfg["num_nodes"], cfg["node_dim"])),
        "tid_emb": xavier(ks[1], (cfg["time_of_day_size"], cfg["temp_dim_tid"])),
        "diw_emb": xavier(ks[2], (cfg["day_of_week_size"], cfg["temp_dim_diw"])),
        # weights stored pre-transposed as [in, out] for per-token matmul
        "W_ts": xavier(ks[3], (Lin, cfg["embed_dim"])),
        "b_ts": jax.random.uniform(ks[4], (1, cfg["embed_dim"]), jnp.float32, -0.1, 0.1),
        "W1": xavier(ks[5], (NL, H, H)),
        "b1": jax.random.uniform(ks[6], (NL, H), jnp.float32, -0.1, 0.1),
        "W2": xavier(ks[7], (NL, H, H)),
        "b2": jax.random.uniform(ks[8], (NL, H), jnp.float32, -0.1, 0.1),
        "W_r": xavier(ks[9], (H, cfg["output_len"])),
        "b_r": jax.random.uniform(ks[10], (1, cfg["output_len"]), jnp.float32, -0.1, 0.1),
    }


# --------------------------------- main ---------------------------------------
if __name__ == "__main__":
    cfg = dict(
        num_nodes=16, node_dim=16, input_len=8, input_dim=1, embed_dim=32,
        output_len=12, num_layer=2, temp_dim_tid=8, temp_dim_diw=8,
        time_of_day_size=48, day_of_week_size=7,
    )
    cfg["hidden_dim"] = (cfg["embed_dim"] + cfg["node_dim"]
                         + cfg["temp_dim_tid"] + cfg["temp_dim_diw"])  # 64

    B, L, N, C = 2, cfg["input_len"], cfg["num_nodes"], 3
    key = jax.random.PRNGKey(0)
    k_data, k_tid, k_diw, k_params = jax.random.split(key, 4)

    # channel 0: signal values; channel 1: integer-valued time-of-day index;
    # channel 2: raw day-of-week signal (normalized inside forward).
    data_ch = jax.random.normal(k_data, (B, L, N, 1), jnp.float32)
    tid_ch = jax.random.randint(k_tid, (B, L, N, 1), 0,
                                cfg["time_of_day_size"]).astype(jnp.float32)
    diw_ch = jax.random.uniform(k_diw, (B, L, N, 1), jnp.float32, 0.0, 7.0)
    history = jnp.concatenate([data_ch, tid_ch, diw_ch], axis=-1)  # [B, L, N, C]

    params = init_params(k_params, cfg)
    ref = stid_reference(history, params, cfg)

    # f32 operands: exact-semantics check against the plain-JAX reference
    pred = stid_forward(history, params, cfg, compute_dtype=jnp.float32)
    pred = jax.block_until_ready(pred)
    assert pred.shape == (B, cfg["output_len"], N, 1)
    assert jnp.allclose(pred, ref, rtol=1e-4, atol=1e-4)

    # default path: bf16 MXU operands, f32 accumulation (loose tolerance)
    pred_bf16 = stid_forward(history, params, cfg)
    pred_bf16 = jax.block_until_ready(pred_bf16)
    assert jnp.allclose(pred_bf16, ref, rtol=1e-1, atol=2e-1)

    print("KERNEL_OK")
</pallas_src>

<mosaic_0001>
module attributes {stable_mosaic.version = 11 : i64} {
  func.func @stid_kernel(%arg0: i32, %arg1: memref<16x40xf32, #tpu.memory_space<vmem>>, %arg2: memref<40x128xf32, #tpu.memory_space<vmem>>, %arg3: memref<1x128xf32, #tpu.memory_space<vmem>>, %arg4: memref<2x128x128xf32, #tpu.memory_space<vmem>>, %arg5: memref<2x1x128xf32, #tpu.memory_space<vmem>>, %arg6: memref<2x128x128xf32, #tpu.memory_space<vmem>>, %arg7: memref<2x1x128xf32, #tpu.memory_space<vmem>>, %arg8: memref<128x12xf32, #tpu.memory_space<vmem>>, %arg9: memref<1x12xf32, #tpu.memory_space<vmem>>, %arg10: memref<16x12xf32, #tpu.memory_space<vmem>>) attributes {dimension_semantics = [#tpu.dimension_semantics<parallel>], iteration_bounds = array<i64: 2>, scalar_prefetch = 0 : i64, scratch_operands = 0 : i64, tpu.core_type = #tpu.core_type<tc>, window_params = [{transform_indices = @transform_0, window_bounds = array<i64: 16, 40>}, {pipeline_mode = #tpu.pipeline_mode<synchronous>, transform_indices = @transform_1, window_bounds = array<i64: 40, 128>}, {pipeline_mode = #tpu.pipeline_mode<synchronous>, transform_indices = @transform_2, window_bounds = array<i64: 1, 128>}, {pipeline_mode = #tpu.pipeline_mode<synchronous>, transform_indices = @transform_3, window_bounds = array<i64: 2, 128, 128>}, {pipeline_mode = #tpu.pipeline_mode<synchronous>, transform_indices = @transform_4, window_bounds = array<i64: 2, 1, 128>}, {pipeline_mode = #tpu.pipeline_mode<synchronous>, transform_indices = @transform_5, window_bounds = array<i64: 2, 128, 128>}, {pipeline_mode = #tpu.pipeline_mode<synchronous>, transform_indices = @transform_6, window_bounds = array<i64: 2, 1, 128>}, {pipeline_mode = #tpu.pipeline_mode<synchronous>, transform_indices = @transform_7, window_bounds = array<i64: 128, 12>}, {pipeline_mode = #tpu.pipeline_mode<synchronous>, transform_indices = @transform_8, window_bounds = array<i64: 1, 12>}, {transform_indices = @transform_9, window_bounds = array<i64: 16, 12>}]} {
    %c0 = arith.constant 0 : index
    %c0_0 = arith.constant 0 : index
    %0 = vector.load %arg1[%c0, %c0_0] : memref<16x40xf32, #tpu.memory_space<vmem>>, vector<16x40xf32>
    %c0_1 = arith.constant 0 : index
    %c0_2 = arith.constant 0 : index
    %1 = vector.load %arg2[%c0_1, %c0_2] : memref<40x128xf32, #tpu.memory_space<vmem>>, vector<40x128xf32>
    %cst = arith.constant dense<0.000000e+00> : vector<16x128xf32>
    %2 = tpu.matmul %0, %1, %cst {dimension_numbers = #tpu.dot_dimension_numbers<[1], [0], [0], [1], [0, 0, 1, 1], [], []>} : vector<16x40xf32>, vector<40x128xf32>, vector<16x128xf32> -> vector<16x128xf32>
    %c0_3 = arith.constant 0 : index
    %c0_4 = arith.constant 0 : index
    %3 = vector.load %arg3[%c0_3, %c0_4] : memref<1x128xf32, #tpu.memory_space<vmem>>, vector<1x128xf32>
    %4 = vector.broadcast %3 : vector<1x128xf32> to vector<16x128xf32>
    %5 = arith.addf %2, %4 : vector<16x128xf32>
    %c0_5 = arith.constant 0 : index
    %c0_6 = arith.constant 0 : index
    %c0_7 = arith.constant 0 : index
    %6 = vector.load %arg4[%c0_5, %c0_6, %c0_7] : memref<2x128x128xf32, #tpu.memory_space<vmem>>, vector<1x128x128xf32>
    %7 = vector.shape_cast %6 : vector<1x128x128xf32> to vector<128x128xf32>
    %c0_8 = arith.constant 0 : index
    %c0_9 = arith.constant 0 : index
    %c0_10 = arith.constant 0 : index
    %8 = vector.load %arg5[%c0_8, %c0_9, %c0_10] : memref<2x1x128xf32, #tpu.memory_space<vmem>>, vector<1x1x128xf32>
    %9 = vector.shape_cast %8 : vector<1x1x128xf32> to vector<1x128xf32>
    %c0_11 = arith.constant 0 : index
    %c0_12 = arith.constant 0 : index
    %c0_13 = arith.constant 0 : index
    %10 = vector.load %arg6[%c0_11, %c0_12, %c0_13] : memref<2x128x128xf32, #tpu.memory_space<vmem>>, vector<1x128x128xf32>
    %11 = vector.shape_cast %10 : vector<1x128x128xf32> to vector<128x128xf32>
    %c0_14 = arith.constant 0 : index
    %c0_15 = arith.constant 0 : index
    %c0_16 = arith.constant 0 : index
    %12 = vector.load %arg7[%c0_14, %c0_15, %c0_16] : memref<2x1x128xf32, #tpu.memory_space<vmem>>, vector<1x1x128xf32>
    %13 = vector.shape_cast %12 : vector<1x1x128xf32> to vector<1x128xf32>
    %cst_17 = arith.constant dense<0.000000e+00> : vector<16x128xf32>
    %14 = tpu.matmul %5, %7, %cst_17 {dimension_numbers = #tpu.dot_dimension_numbers<[1], [0], [0], [1], [0, 0, 1, 1], [], []>} : vector<16x128xf32>, vector<128x128xf32>, vector<16x128xf32> -> vector<16x128xf32>
    %15 = vector.broadcast %9 : vector<1x128xf32> to vector<16x128xf32>
    %16 = arith.addf %14, %15 : vector<16x128xf32>
    %cst_18 = arith.constant 0.000000e+00 : f32
    %17 = vector.broadcast %cst_18 : f32 to vector<16x128xf32>
    %18 = arith.maximumf %16, %17 : vector<16x128xf32>
    %cst_19 = arith.constant dense<0.000000e+00> : vector<16x128xf32>
    %19 = tpu.matmul %18, %11, %cst_19 {dimension_numbers = #tpu.dot_dimension_numbers<[1], [0], [0], [1], [0, 0, 1, 1], [], []>} : vector<16x128xf32>, vector<128x128xf32>, vector<16x128xf32> -> vector<16x128xf32>
    %20 = vector.broadcast %13 : vector<1x128xf32> to vector<16x128xf32>
    %21 = arith.addf %19, %20 : vector<16x128xf32>
    %22 = arith.addf %21, %5 : vector<16x128xf32>
    %c1 = arith.constant 1 : index
    %c0_20 = arith.constant 0 : index
    %c0_21 = arith.constant 0 : index
    %23 = vector.load %arg4[%c1, %c0_20, %c0_21] : memref<2x128x128xf32, #tpu.memory_space<vmem>>, vector<1x128x128xf32>
    %24 = vector.shape_cast %23 : vector<1x128x128xf32> to vector<128x128xf32>
    %c1_22 = arith.constant 1 : index
    %c0_23 = arith.constant 0 : index
    %c0_24 = arith.constant 0 : index
    %25 = vector.load %arg5[%c1_22, %c0_23, %c0_24] : memref<2x1x128xf32, #tpu.memory_space<vmem>>, vector<1x1x128xf32>
    %26 = vector.shape_cast %25 : vector<1x1x128xf32> to vector<1x128xf32>
    %c1_25 = arith.constant 1 : index
    %c0_26 = arith.constant 0 : index
    %c0_27 = arith.constant 0 : index
    %27 = vector.load %arg6[%c1_25, %c0_26, %c0_27] : memref<2x128x128xf32, #tpu.memory_space<vmem>>, vector<1x128x128xf32>
    %28 = vector.shape_cast %27 : vector<1x128x128xf32> to vector<128x128xf32>
    %c1_28 = arith.constant 1 : index
    %c0_29 = arith.constant 0 : index
    %c0_30 = arith.constant 0 : index
    %29 = vector.load %arg7[%c1_28, %c0_29, %c0_30] : memref<2x1x128xf32, #tpu.memory_space<vmem>>, vector<1x1x128xf32>
    %30 = vector.shape_cast %29 : vector<1x1x128xf32> to vector<1x128xf32>
    %cst_31 = arith.constant dense<0.000000e+00> : vector<16x128xf32>
    %31 = tpu.matmul %22, %24, %cst_31 {dimension_numbers = #tpu.dot_dimension_numbers<[1], [0], [0], [1], [0, 0, 1, 1], [], []>} : vector<16x128xf32>, vector<128x128xf32>, vector<16x128xf32> -> vector<16x128xf32>
    %32 = vector.broadcast %26 : vector<1x128xf32> to vector<16x128xf32>
    %33 = arith.addf %31, %32 : vector<16x128xf32>
    %cst_32 = arith.constant 0.000000e+00 : f32
    %34 = vector.broadcast %cst_32 : f32 to vector<16x128xf32>
    %35 = arith.maximumf %33, %34 : vector<16x128xf32>
    %cst_33 = arith.constant dense<0.000000e+00> : vector<16x128xf32>
    %36 = tpu.matmul %35, %28, %cst_33 {dimension_numbers = #tpu.dot_dimension_numbers<[1], [0], [0], [1], [0, 0, 1, 1], [], []>} : vector<16x128xf32>, vector<128x128xf32>, vector<16x128xf32> -> vector<16x128xf32>
    %37 = vector.broadcast %30 : vector<1x128xf32> to vector<16x128xf32>
    %38 = arith.addf %36, %37 : vector<16x128xf32>
    %39 = arith.addf %38, %22 : vector<16x128xf32>
    %c0_34 = arith.constant 0 : index
    %c0_35 = arith.constant 0 : index
    %40 = vector.load %arg8[%c0_34, %c0_35] : memref<128x12xf32, #tpu.memory_space<vmem>>, vector<128x12xf32>
    %cst_36 = arith.constant dense<0.000000e+00> : vector<16x12xf32>
    %41 = tpu.matmul %39, %40, %cst_36 {dimension_numbers = #tpu.dot_dimension_numbers<[1], [0], [0], [1], [0, 0, 1, 1], [], []>} : vector<16x128xf32>, vector<128x12xf32>, vector<16x12xf32> -> vector<16x12xf32>
    %c0_37 = arith.constant 0 : index
    %c0_38 = arith.constant 0 : index
    %42 = vector.load %arg9[%c0_37, %c0_38] : memref<1x12xf32, #tpu.memory_space<vmem>>, vector<1x12xf32>
    %43 = vector.broadcast %42 : vector<1x12xf32> to vector<16x12xf32>
    %44 = arith.addf %41, %43 : vector<16x12xf32>
    %c0_39 = arith.constant 0 : index
    %c0_40 = arith.constant 0 : index
    %45 = vector.load %arg10[%c0_39, %c0_40] : memref<16x12xf32, #tpu.memory_space<vmem>>, vector<16x12xf32>
    tpu.vector_store %arg10[%c0_39, %c0_40], %44 {strides = array<i32>} : memref<16x12xf32, #tpu.memory_space<vmem>>, vector<16x12xf32>,
    return
  }
  func.func @transform_0(%arg0: i32) -> (i32, i32) {
    %c0_i32 = arith.constant 0 : i32
    %c0_i32_0 = arith.constant 0 : i32
    return %arg0, %c0_i32 : i32, i32
  }
  func.func @transform_1(%arg0: i32) -> (i32, i32) {
    %c0_i32 = arith.constant 0 : i32
    %c0_i32_0 = arith.constant 0 : i32
    %c0_i32_1 = arith.constant 0 : i32
    return %c0_i32, %c0_i32_0 : i32, i32
  }
  func.func @transform_2(%arg0: i32) -> (i32, i32) {
    %c0_i32 = arith.constant 0 : i32
    %c0_i32_0 = arith.constant 0 : i32
    %c0_i32_1 = arith.constant 0 : i32
    return %c0_i32, %c0_i32_0 : i32, i32
  }
  func.func @transform_3(%arg0: i32) -> (i32, i32, i32) {
    %c0_i32 = arith.constant 0 : i32
    %c0_i32_0 = arith.constant 0 : i32
    %c0_i32_1 = arith.constant 0 : i32
    %c0_i32_2 = arith.constant 0 : i32
    return %c0_i32, %c0_i32_0, %c0_i32_1 : i32, i32, i32
  }
  func.func @transform_4(%arg0: i32) -> (i32, i32, i32) {
    %c0_i32 = arith.constant 0 : i32
    %c0_i32_0 = arith.constant 0 : i32
    %c0_i32_1 = arith.constant 0 : i32
    %c0_i32_2 = arith.constant 0 : i32
    return %c0_i32, %c0_i32_0, %c0_i32_1 : i32, i32, i32
  }
  func.func @transform_5(%arg0: i32) -> (i32, i32, i32) {
    %c0_i32 = arith.constant 0 : i32
    %c0_i32_0 = arith.constant 0 : i32
    %c0_i32_1 = arith.constant 0 : i32
    %c0_i32_2 = arith.constant 0 : i32
    return %c0_i32, %c0_i32_0, %c0_i32_1 : i32, i32, i32
  }
  func.func @transform_6(%arg0: i32) -> (i32, i32, i32) {
    %c0_i32 = arith.constant 0 : i32
    %c0_i32_0 = arith.constant 0 : i32
    %c0_i32_1 = arith.constant 0 : i32
    %c0_i32_2 = arith.constant 0 : i32
    return %c0_i32, %c0_i32_0, %c0_i32_1 : i32, i32, i32
  }
  func.func @transform_7(%arg0: i32) -> (i32, i32) {
    %c0_i32 = arith.constant 0 : i32
    %c0_i32_0 = arith.constant 0 : i32
    %c0_i32_1 = arith.constant 0 : i32
    return %c0_i32, %c0_i32_0 : i32, i32
  }
  func.func @transform_8(%arg0: i32) -> (i32, i32) {
    %c0_i32 = arith.constant 0 : i32
    %c0_i32_0 = arith.constant 0 : i32
    %c0_i32_1 = arith.constant 0 : i32
    return %c0_i32, %c0_i32_0 : i32, i32
  }
  func.func @transform_9(%arg0: i32) -> (i32, i32) {
    %c0_i32 = arith.constant 0 : i32
    %c0_i32_0 = arith.constant 0 : i32
    return %arg0, %c0_i32 : i32, i32
  }
}

</mosaic_0001>

<llo_original>
// kernel: tpu_custom_call.1
$region0: #{tpu_custom_call.1}
  #allocation0 [shape = 'u32[]', space=smem, size = 0x4, offset = 0x4, fixed_abs, tag = 'smem constant byte address 0x4 - core index']
  #allocation1 [shape = 'u32[72,128]{1,0:T(1,128)}', space=vmem, size = 0x9000, scoped, tag = 'internal scratch']
  %s0 = inlined_call_operand.vmem [shape: f32[32,40], index: 0, kind: input, shape index: {}]
  %s1 = inlined_call_operand.vmem [shape: f32[40,128], index: 1, kind: input, shape index: {}]
  %s2 = inlined_call_operand.vmem [shape: f32[1,128], index: 2, kind: input, shape index: {}]
  %s3 = inlined_call_operand.hbm [shape: f32[2,128,128], index: 3, kind: input, shape index: {}]
  %s4 = inlined_call_operand.vmem [shape: f32[2,1,128], index: 4, kind: input, shape index: {}]
  %s5 = inlined_call_operand.hbm [shape: f32[2,128,128], index: 5, kind: input, shape index: {}]
  %s6 = inlined_call_operand.vmem [shape: f32[2,1,128], index: 6, kind: input, shape index: {}]
  %s7 = inlined_call_operand.vmem [shape: f32[128,12], index: 7, kind: input, shape index: {}]
  %s8 = inlined_call_operand.vmem [shape: f32[1,12], index: 8, kind: input, shape index: {}]
  %s9 = inlined_call_operand.vmem [shape: f32[32,12], index: 9, kind: output, shape index: {}]
  %s10 = sld [smem:[#allocation0]]
  $region77: #{tpu_custom_call.1} parent=0
    _
  %s12 = ssub.s32 1, %s10
  %s13 = scalar_select 0, %s12, %s10
  $region1: #{tpu_custom_call.1} parent=0
    #allocation2 [shape = 'u8[131072]{0}', space=vmem, size = 0x20000, scoped, tag = 'input window, operand 3, single buffered']
    #allocation3 [shape = 's32[2]{0}', space=sflag, size = 0x8, scoped, tag = 'scoped memory for tpu_custom_call.1']
    #allocation4 [shape = 'u8[131072]{0}', space=vmem, size = 0x20000, scoped, tag = 'input window, operand 5, single buffered']
    #allocation5 [shape = 's32[1]{0}', space=sflag, size = 0x4, scoped, tag = 'scoped memory for tpu_custom_call.1']
    %14 = vsyncpa [#allocation3], 0
    %15 = vsyncpa [#allocation5], 0
    loop: start=0, step=1, limit=4
    $region2: #{tpu_custom_call.1} parent=1 // loop_pre_header
      _
    $region3: #{tpu_custom_call.1} parent=1 // loop_header
      %s17 = sphi 0, %s21
      %p18 = scmp.ge.s32.totalorder %s17, 4
      %s27 = sphi 0, %s29
      %s30 = sphi 0, %s27
      %s31 = sphi 0, %s30
      %s47 = sphi 0, %s31
      %s51 = sphi 0, %s51
      %s53 = sphi 0, %s51
      %s54 = sphi 0, %s53
      %s68 = sphi 0, %s54
      %s72 = sphi 0, %s72
      %s74 = sphi 0, %s72
      %s75 = sphi 0, %s74
      %s89 = sphi 0, %s75
      %s93 = sphi 0, %s93
      %s95 = sphi 0, %s93
      %s96 = sphi 0, %s95
      %s110 = sphi 0, %s96
      %s114 = sphi 0, %s114
      %s116 = sphi 0, %s114
      %s117 = sphi 0, %s116
      %s131 = sphi 0, %s117
      %s135 = sphi 0, %s135
      %s137 = sphi 0, %s135
      %s138 = sphi 0, %s137
      %s152 = sphi 0, %s138
      %s156 = sphi 0, %s156
      %s158 = sphi 0, %s156
      %s159 = sphi 0, %s158
      %s173 = sphi 0, %s159
      %s177 = sphi 0, %s177
      %s179 = sphi 0, %s177
      %s180 = sphi 0, %s179
      %s194 = sphi 0, %s180
      %s198 = sphi 0, %s198
      %s200 = sphi 0, %s198
      %s201 = sphi 0, %s200
      %s215 = sphi 0, %s201
      %s221 = sphi 0, %s223
      %s224 = sphi 0, %s221
      %s225 = sphi 0, %s224
      %s241 = sphi 0, %s225
    $region4: #{tpu_custom_call.1} parent=1 // loop_header_branch
      %20 = sbr.rel (%p18) target = $region8
    $region5: #{tpu_custom_call.1} parent=1 // loop_body
      %s22 = ssub.s32 %s17, 1
      %s23 = ssub.s32 %s17, 2
      %s24 = sadd.s32 %s17, 1
      %s25 = ssub.s32 %s17, %s24
      %p26 = scmp.eq.s32.totalorder %s25, 0
      %s28 = sadd.s32 %s27, 1
      %s29 = scalar_select %p26, %s27, %s28
      %p32 = pneg %p26
      %p33 = scmp.eq.s32.totalorder %s17, 1
      %p34 = por %p32, %p33
      %p35 = scmp.ne.s32.totalorder %s27, %s30
      %p36 = scmp.eq.s32.totalorder %s17, 0
      %p37 = por %p35, %p36
      %p38 = scmp.ne.s32.totalorder %s27, %s30
      %p39 = scmp.eq.s32.totalorder %s22, 1
      %p40 = por %p38, %p39
      %p41 = scmp.ne.s32.totalorder %s30, %s31
      %p42 = scmp.eq.s32.totalorder %s22, 0
      %p43 = por %p41, %p42
      %p44 = scmp.ne.s32.totalorder %s30, %s31
      %p45 = scmp.eq.s32.totalorder %s23, 1
      %p46 = por %p44, %p45
      %p48 = scmp.ne.s32.totalorder %s31, %s47
      %p49 = scmp.eq.s32.totalorder %s23, 0
      %p50 = por %p48, %p49
      %s52 = sadd.s32 %s51, 1
      %p55 = scmp.eq.s32.totalorder %s17, 1
      %p56 = scmp.ne.s32.totalorder %s51, %s53
      %p57 = scmp.eq.s32.totalorder %s17, 0
      %p58 = por %p56, %p57
      %p59 = scmp.ne.s32.totalorder %s51, %s53
      %p60 = scmp.eq.s32.totalorder %s22, 1
      %p61 = por %p59, %p60
      %p62 = scmp.ne.s32.totalorder %s53, %s54
      %p63 = scmp.eq.s32.totalorder %s22, 0
      %p64 = por %p62, %p63
      %p65 = scmp.ne.s32.totalorder %s53, %s54
      %p66 = scmp.eq.s32.totalorder %s23, 1
      %p67 = por %p65, %p66
      %p69 = scmp.ne.s32.totalorder %s54, %s68
      %p70 = scmp.eq.s32.totalorder %s23, 0
      %p71 = por %p69, %p70
      %s73 = sadd.s32 %s72, 1
      %p76 = scmp.eq.s32.totalorder %s17, 1
      %p77 = scmp.ne.s32.totalorder %s72, %s74
      %p78 = scmp.eq.s32.totalorder %s17, 0
      %p79 = por %p77, %p78
      %p80 = scmp.ne.s32.totalorder %s72, %s74
      %p81 = scmp.eq.s32.totalorder %s22, 1
      %p82 = por %p80, %p81
      %p83 = scmp.ne.s32.totalorder %s74, %s75
      %p84 = scmp.eq.s32.totalorder %s22, 0
      %p85 = por %p83, %p84
      %p86 = scmp.ne.s32.totalorder %s74, %s75
      %p87 = scmp.eq.s32.totalorder %s23, 1
      %p88 = por %p86, %p87
      %p90 = scmp.ne.s32.totalorder %s75, %s89
      %p91 = scmp.eq.s32.totalorder %s23, 0
      %p92 = por %p90, %p91
      %s94 = sadd.s32 %s93, 1
      %p97 = scmp.eq.s32.totalorder %s17, 1
      %p98 = scmp.ne.s32.totalorder %s93, %s95
      %p99 = scmp.eq.s32.totalorder %s17, 0
      %p100 = por %p98, %p99
      %p101 = scmp.ne.s32.totalorder %s93, %s95
      %p102 = scmp.eq.s32.totalorder %s22, 1
      %p103 = por %p101, %p102
      %p104 = scmp.ne.s32.totalorder %s95, %s96
      %p105 = scmp.eq.s32.totalorder %s22, 0
      %p106 = por %p104, %p105
      %p107 = scmp.ne.s32.totalorder %s95, %s96
      %p108 = scmp.eq.s32.totalorder %s23, 1
      %p109 = por %p107, %p108
      %p111 = scmp.ne.s32.totalorder %s96, %s110
      %p112 = scmp.eq.s32.totalorder %s23, 0
      %p113 = por %p111, %p112
      %s115 = sadd.s32 %s114, 1
      %p118 = scmp.eq.s32.totalorder %s17, 1
      %p119 = scmp.ne.s32.totalorder %s114, %s116
      %p120 = scmp.eq.s32.totalorder %s17, 0
      %p121 = por %p119, %p120
      %p122 = scmp.ne.s32.totalorder %s114, %s116
      %p123 = scmp.eq.s32.totalorder %s22, 1
      %p124 = por %p122, %p123
      %p125 = scmp.ne.s32.totalorder %s116, %s117
      %p126 = scmp.eq.s32.totalorder %s22, 0
      %p127 = por %p125, %p126
      %p128 = scmp.ne.s32.totalorder %s116, %s117
      %p129 = scmp.eq.s32.totalorder %s23, 1
      %p130 = por %p128, %p129
      %p132 = scmp.ne.s32.totalorder %s117, %s131
      %p133 = scmp.eq.s32.totalorder %s23, 0
      %p134 = por %p132, %p133
      %s136 = sadd.s32 %s135, 1
      %p139 = scmp.eq.s32.totalorder %s17, 1
      %p140 = scmp.ne.s32.totalorder %s135, %s137
      %p141 = scmp.eq.s32.totalorder %s17, 0
      %p142 = por %p140, %p141
      %p143 = scmp.ne.s32.totalorder %s135, %s137
      %p144 = scmp.eq.s32.totalorder %s22, 1
      %p145 = por %p143, %p144
      %p146 = scmp.ne.s32.totalorder %s137, %s138
      %p147 = scmp.eq.s32.totalorder %s22, 0
      %p148 = por %p146, %p147
      %p149 = scmp.ne.s32.totalorder %s137, %s138
      %p150 = scmp.eq.s32.totalorder %s23, 1
      %p151 = por %p149, %p150
      %p153 = scmp.ne.s32.totalorder %s138, %s152
      %p154 = scmp.eq.s32.totalorder %s23, 0
      %p155 = por %p153, %p154
      %s157 = sadd.s32 %s156, 1
      %p160 = scmp.eq.s32.totalorder %s17, 1
      %p161 = scmp.ne.s32.totalorder %s156, %s158
      %p162 = scmp.eq.s32.totalorder %s17, 0
      %p163 = por %p161, %p162
      %p164 = scmp.ne.s32.totalorder %s156, %s158
      %p165 = scmp.eq.s32.totalorder %s22, 1
      %p166 = por %p164, %p165
      %p167 = scmp.ne.s32.totalorder %s158, %s159
      %p168 = scmp.eq.s32.totalorder %s22, 0
      %p169 = por %p167, %p168
      %p170 = scmp.ne.s32.totalorder %s158, %s159
      %p171 = scmp.eq.s32.totalorder %s23, 1
      %p172 = por %p170, %p171
      %p174 = scmp.ne.s32.totalorder %s159, %s173
      %p175 = scmp.eq.s32.totalorder %s23, 0
      %p176 = por %p174, %p175
      %s178 = sadd.s32 %s177, 1
      %p181 = scmp.eq.s32.totalorder %s17, 1
      %p182 = scmp.ne.s32.totalorder %s177, %s179
      %p183 = scmp.eq.s32.totalorder %s17, 0
      %p184 = por %p182, %p183
      %p185 = scmp.ne.s32.totalorder %s177, %s179
      %p186 = scmp.eq.s32.totalorder %s22, 1
      %p187 = por %p185, %p186
      %p188 = scmp.ne.s32.totalorder %s179, %s180
      %p189 = scmp.eq.s32.totalorder %s22, 0
      %p190 = por %p188, %p189
      %p191 = scmp.ne.s32.totalorder %s179, %s180
      %p192 = scmp.eq.s32.totalorder %s23, 1
      %p193 = por %p191, %p192
      %p195 = scmp.ne.s32.totalorder %s180, %s194
      %p196 = scmp.eq.s32.totalorder %s23, 0
      %p197 = por %p195, %p196
      %s199 = sadd.s32 %s198, 1
      %p202 = scmp.eq.s32.totalorder %s17, 1
      %p203 = scmp.ne.s32.totalorder %s198, %s200
      %p204 = scmp.eq.s32.totalorder %s17, 0
      %p205 = por %p203, %p204
      %p206 = scmp.ne.s32.totalorder %s198, %s200
      %p207 = scmp.eq.s32.totalorder %s22, 1
      %p208 = por %p206, %p207
      %p209 = scmp.ne.s32.totalorder %s200, %s201
      %p210 = scmp.eq.s32.totalorder %s22, 0
      %p211 = por %p209, %p210
      %p212 = scmp.ne.s32.totalorder %s200, %s201
      %p213 = scmp.eq.s32.totalorder %s23, 1
      %p214 = por %p212, %p213
      %p216 = scmp.ne.s32.totalorder %s201, %s215
      %p217 = scmp.eq.s32.totalorder %s23, 0
      %p218 = por %p216, %p217
      %s219 = ssub.s32 %s17, %s24
      %p220 = scmp.eq.s32.totalorder %s219, 0
      %s222 = sadd.s32 %s221, 1
      %s223 = scalar_select %p220, %s221, %s222
      %p226 = pneg %p220
      %p227 = scmp.eq.s32.totalorder %s17, 1
      %p228 = por %p226, %p227
      %p229 = scmp.ne.s32.totalorder %s221, %s224
      %p230 = scmp.eq.s32.totalorder %s17, 0
      %p231 = por %p229, %p230
      %p232 = scmp.ne.s32.totalorder %s221, %s224
      %p233 = scmp.eq.s32.totalorder %s22, 1
      %p234 = por %p232, %p233
      %p235 = scmp.ne.s32.totalorder %s224, %s225
      %p236 = scmp.eq.s32.totalorder %s22, 0
      %p237 = por %p235, %p236
      %p238 = scmp.ne.s32.totalorder %s224, %s225
      %p239 = scmp.eq.s32.totalorder %s23, 1
      %p240 = por %p238, %p239
      %p242 = scmp.ne.s32.totalorder %s225, %s241
      %p243 = scmp.eq.s32.totalorder %s23, 0
      %p244 = por %p242, %p243
      %p245 = scmp.le.s32.totalorder 1, %s17
      %p246 = scmp.lt.s32.totalorder %s17, 3
      %p247 = pnand %p245, %p246
      %p248 = pneg %p247
      // Predicated region
      $region9: #{tpu_custom_call.1} parent=5 // pred_check
        _
      $region10: #{tpu_custom_call.1} parent=5 // pred_check_branch
        %250 = sbr.rel (%p247) target = $region12
      $region11: #{tpu_custom_call.1} parent=5 // pred_region
        %s251 = ssub.s32 %s17, 1
        // Predicated region
        $region13: #{tpu_custom_call.1} parent=11 // pred_check
          %p252 = pneg %p64
        $region14: #{tpu_custom_call.1} parent=11 // pred_check_branch
          %254 = sbr.rel (%p252) target = $region16
        $region15: #{tpu_custom_call.1} parent=11 // pred_region
          _
        $region16: #{tpu_custom_call.1} parent=11 // pred_fallthru
          _
        // Predicated region
        $region17: #{tpu_custom_call.1} parent=11 // pred_check
          %p255 = pneg %p85
        $region18: #{tpu_custom_call.1} parent=11 // pred_check_branch
          %257 = sbr.rel (%p255) target = $region20
        $region19: #{tpu_custom_call.1} parent=11 // pred_region
          _
        $region20: #{tpu_custom_call.1} parent=11 // pred_fallthru
          _
        // Predicated region
        $region21: #{tpu_custom_call.1} parent=11 // pred_check
          %p258 = pneg %p106
        $region22: #{tpu_custom_call.1} parent=11 // pred_check_branch
          %260 = sbr.rel (%p258) target = $region24
        $region23: #{tpu_custom_call.1} parent=11 // pred_region
          %262 = vsyncadd [#allocation3], 0
          %s263 = sshll.u32 %s3, 4
          %s264 = int_to_ptr.hbm [resolvable:$true] %s263
          %s265 = sshll.u32 [#allocation2], 4
          %s266 = int_to_ptr.vmem [resolvable:$true] %s265
          %271 = dma.hbm_to_vmem [thread:$0]  %s264, 4096, %s266, [#allocation3], 128, 128, 8
        $region24: #{tpu_custom_call.1} parent=11 // pred_fallthru
          _
        // Predicated region
        $region25: #{tpu_custom_call.1} parent=11 // pred_check
          %p272 = pneg %p127
        $region26: #{tpu_custom_call.1} parent=11 // pred_check_branch
          %274 = sbr.rel (%p272) target = $region28
        $region27: #{tpu_custom_call.1} parent=11 // pred_region
          _
        $region28: #{tpu_custom_call.1} parent=11 // pred_fallthru
          _
        // Predicated region
        $region29: #{tpu_custom_call.1} parent=11 // pred_check
          %p275 = pneg %p148
        $region30: #{tpu_custom_call.1} parent=11 // pred_check_branch
          %277 = sbr.rel (%p275) target = $region32
        $region31: #{tpu_custom_call.1} parent=11 // pred_region
          %279 = vsyncadd [#allocation5], 0
          %s280 = sshll.u32 %s5, 4
          %s281 = int_to_ptr.hbm [resolvable:$true] %s280
          %s282 = sshll.u32 [#allocation4], 4
          %s283 = int_to_ptr.vmem [resolvable:$true] %s282
          %288 = dma.hbm_to_vmem [thread:$0]  %s281, 4096, %s283, [#allocation5], 128, 128, 8
        $region32: #{tpu_custom_call.1} parent=11 // pred_fallthru
          _
        // Predicated region
        $region33: #{tpu_custom_call.1} parent=11 // pred_check
          %p289 = pneg %p169
        $region34: #{tpu_custom_call.1} parent=11 // pred_check_branch
          %291 = sbr.rel (%p289) target = $region36
        $region35: #{tpu_custom_call.1} parent=11 // pred_region
          _
        $region36: #{tpu_custom_call.1} parent=11 // pred_fallthru
          _
        // Predicated region
        $region37: #{tpu_custom_call.1} parent=11 // pred_check
          %p292 = pneg %p190
        $region38: #{tpu_custom_call.1} parent=11 // pred_check_branch
          %294 = sbr.rel (%p292) target = $region40
        $region39: #{tpu_custom_call.1} parent=11 // pred_region
          _
        $region40: #{tpu_custom_call.1} parent=11 // pred_fallthru
          _
        // Predicated region
        $region41: #{tpu_custom_call.1} parent=11 // pred_check
          %p295 = pneg %p211
        $region42: #{tpu_custom_call.1} parent=11 // pred_check_branch
          %297 = sbr.rel (%p295) target = $region44
        $region43: #{tpu_custom_call.1} parent=11 // pred_region
          _
        $region44: #{tpu_custom_call.1} parent=11 // pred_fallthru
          _
      $region12: #{tpu_custom_call.1} parent=5 // pred_fallthru
        _
      %p298 = scmp.lt.s32.totalorder %s17, 2
      // Predicated region
      $region45: #{tpu_custom_call.1} parent=5 // pred_check
        %p299 = pneg %p298
      $region46: #{tpu_custom_call.1} parent=5 // pred_check_branch
        %301 = sbr.rel (%p299) target = $region48
      $region47: #{tpu_custom_call.1} parent=5 // pred_region
        // Predicated region
        $region49: #{tpu_custom_call.1} parent=47 // pred_check
          %p302 = pneg %p37
        $region50: #{tpu_custom_call.1} parent=47 // pred_check_branch
          %304 = sbr.rel (%p302) target = $region52
        $region51: #{tpu_custom_call.1} parent=47 // pred_region
          %s305 = smul.u32 2, %s17
          %p306 = scmp.lt.s32.totalorder %s305, 3
          %s307 = scalar_select %p306, %s305, 3
          %s308 = smul.addr %s307, 8
          %s309 = scalar_lea.vmem %s0, %s308
          %s310 = smul.u32 2, %s17
        $region52: #{tpu_custom_call.1} parent=47 // pred_fallthru
          _
      $region48: #{tpu_custom_call.1} parent=5 // pred_fallthru
        _
      %p311 = scmp.le.s32.totalorder 1, %s17
      %p312 = scmp.lt.s32.totalorder %s17, 3
      %p313 = pnand %p311, %p312
      %p314 = pneg %p313
      // Predicated region
      $region53: #{tpu_custom_call.1} parent=5 // pred_check
        _
      $region54: #{tpu_custom_call.1} parent=5 // pred_check_branch
        %316 = sbr.rel (%p313) target = $region56
      $region55: #{tpu_custom_call.1} parent=5 // pred_region
        %s317 = ssub.s32 %s17, 1
        // Predicated region
        $region57: #{tpu_custom_call.1} parent=55 // pred_check
          %p318 = pneg %p106
        $region58: #{tpu_custom_call.1} parent=55 // pred_check_branch
          %320 = sbr.rel (%p318) target = $region60
        $region59: #{tpu_custom_call.1} parent=55 // pred_region
          %322 = dma.done [#allocation3], 4096
        $region60: #{tpu_custom_call.1} parent=55 // pred_fallthru
          _
        // Predicated region
        $region61: #{tpu_custom_call.1} parent=55 // pred_check
          %p323 = pneg %p148
        $region62: #{tpu_custom_call.1} parent=55 // pred_check_branch
          %325 = sbr.rel (%p323) target = $region64
        $region63: #{tpu_custom_call.1} parent=55 // pred_region
          %327 = dma.done [#allocation5], 4096
        $region64: #{tpu_custom_call.1} parent=55 // pred_fallthru
          _
        %s328 = smul.u32 2, %s22
        %p329 = scmp.lt.s32.totalorder %s328, 3
        %s330 = scalar_select %p329, %s328, 3
        %s331 = smul.addr %s330, 8
        %s332 = scalar_lea.vmem %s0, %s331
        %p333 = pneg %p43
        %p334 = pneg %p40
        %p335 = pneg %p64
        %p336 = pneg %p61
        %p337 = pneg %p85
        %p338 = pneg %p82
        %p339 = pneg %p106
        %p340 = pneg %p103
        %p341 = pneg %p127
        %p342 = pneg %p124
        %p343 = pneg %p148
        %p344 = pneg %p145
        %p345 = pneg %p169
        %p346 = pneg %p166
        %p347 = pneg %p190
        %p348 = pneg %p187
        %p349 = pneg %p211
        %p350 = pneg %p208
        %p351 = pneg %p237
        %p352 = pneg %p234
        %s353 = smul.u32 2, %s22
        %p354 = scmp.lt.s32.totalorder %s353, 3
        %s355 = scalar_select %p354, %s353, 3
        %s356 = smul.addr %s355, 8
        %s357 = scalar_lea.vmem %s9, %s356
        %s358 = smul.u32 2, %s22
        %p359 = scmp.lt.s32.totalorder %s358, 3
        %s360 = scalar_select %p359, %s358, 3
        %s361 = smul.addr %s360, 8
        %s362 = scalar_lea.vmem %s0, %s361
        %s363 = smul.u32 2, %s22
        %s364 = smul.u32 2, %s22
        %p365 = scmp.lt.s32.totalorder %s364, 3
        %s366 = scalar_select %p365, %s364, 3
        %s367 = smul.addr %s366, 8
        %s368 = scalar_lea.vmem %s9, %s367
        %s369 = smul.u32 2, %s22
        %v370 = vld [vmem:[%s362] sm:$0xff]
        %v371 = vld [vmem:[%s362 + $0x8] sm:$0xff]
        %v372 = vld [vmem:[%s1] sm:$0xff]
        %v373 = vld [vmem:[%s1 + $0x8] sm:$0xff]
        %v374 = vld [vmem:[%s1 + $0x10] sm:$0xff]
        %v375 = vld [vmem:[%s1 + $0x18] sm:$0xff]
        %v376 = vld [vmem:[%s1 + $0x20] sm:$0xff]
        %v377 = vld [vmem:[%s2] sm:$0x1]
        %v379 = vperm.slane %v377, 0
        %vm381 = vcmask 326656
        %v383 = vsel %vm381, %v370, 0
        %v386 = vsel %vm381, %v371, 0
        %388 = vmatpush.msra.mxu0 0.0
        %389 = vmatpush.msra.mxu0 0.0
        %390 = vmatpush.msra.mxu0 0.0
        %391 = vmatpush.msra.mxu0 0.0
        %392 = vmatpush.msra.mxu0 0.0
        %393 = vmatpush.msra.mxu0 0.0
        %394 = vmatpush.msra.mxu0 0.0
        %395 = vmatpush.msra.mxu0 0.0
        %396 = vmatpush.msra.mxu0 0.0
        %397 = vmatpush.msra.mxu0 0.0
        %398 = vmatpush.msra.mxu0 0.0
        %399 = vmatpush.msra.mxu0 %v376
        %400 = vmatpush.msra.mxu0 %v375
        %401 = vmatpush.msra.mxu0 %v374
        %402 = vmatpush.msra.mxu0 %v373
        %403 = vmatpush.msra.mxu0 %v372
        %404 = vmatmul.f32.gmra.mxu0 %v383
        %v405 = vpop.f32.mrf.mxu0
        %v406 = vadd.f32 %v379, %v405
        %407 = vmatmul.f32.gmra.mxu0 %v386
        %v408 = vpop.f32.mrf.mxu0
        %v409 = vadd.f32 %v379, %v408
        %410 = vdwg.mxu0
        %v411 = vld [vmem:[#allocation2] sm:$0xff]
        %v412 = vld [vmem:[#allocation2 + $0x8] sm:$0xff]
        %v413 = vld [vmem:[#allocation2 + $0x10] sm:$0xff]
        %v414 = vld [vmem:[#allocation2 + $0x18] sm:$0xff]
        %v415 = vld [vmem:[#allocation2 + $0x20] sm:$0xff]
        %v416 = vld [vmem:[#allocation2 + $0x28] sm:$0xff]
        %v417 = vld [vmem:[#allocation2 + $0x30] sm:$0xff]
        %v418 = vld [vmem:[#allocation2 + $0x38] sm:$0xff]
        %v419 = vld [vmem:[#allocation2 + $0x40] sm:$0xff]
        %v420 = vld [vmem:[#allocation2 + $0x48] sm:$0xff]
        %v421 = vld [vmem:[#allocation2 + $0x50] sm:$0xff]
        %v422 = vld [vmem:[#allocation2 + $0x58] sm:$0xff]
        %v423 = vld [vmem:[#allocation2 + $0x60] sm:$0xff]
        %v424 = vld [vmem:[#allocation2 + $0x68] sm:$0xff]
        %v425 = vld [vmem:[#allocation2 + $0x70] sm:$0xff]
        %v426 = vld [vmem:[#allocation2 + $0x78] sm:$0xff]
        %v427 = vld [vmem:[%s4] sm:$0x1]
        %v428 = vld [vmem:[#allocation4] sm:$0xff]
        %v429 = vld [vmem:[#allocation4 + $0x8] sm:$0xff]
        %v430 = vld [vmem:[#allocation4 + $0x10] sm:$0xff]
        %v431 = vld [vmem:[#allocation4 + $0x18] sm:$0xff]
        %v432 = vld [vmem:[#allocation4 + $0x20] sm:$0xff]
        %v433 = vld [vmem:[#allocation4 + $0x28] sm:$0xff]
        %v434 = vld [vmem:[#allocation4 + $0x30] sm:$0xff]
        %v435 = vld [vmem:[#allocation4 + $0x38] sm:$0xff]
        %v436 = vld [vmem:[#allocation4 + $0x40] sm:$0xff]
        %v437 = vld [vmem:[#allocation4 + $0x48] sm:$0xff]
        %v438 = vld [vmem:[#allocation4 + $0x50] sm:$0xff]
        %v439 = vld [vmem:[#allocation4 + $0x58] sm:$0xff]
        %v440 = vld [vmem:[#allocation4 + $0x60] sm:$0xff]
        %v441 = vld [vmem:[#allocation4 + $0x68] sm:$0xff]
        %v442 = vld [vmem:[#allocation4 + $0x70] sm:$0xff]
        %v443 = vld [vmem:[#allocation4 + $0x78] sm:$0xff]
        %v444 = vld [vmem:[%s6] sm:$0x1]
        %v446 = vperm.slane %v427, 0
        %448 = vmatpush.msra.mxu0 %v426
        %449 = vmatpush.msra.mxu0 %v425
        %450 = vmatpush.msra.mxu0 %v424
        %451 = vmatpush.msra.mxu0 %v423
        %452 = vmatpush.msra.mxu0 %v422
        %453 = vmatpush.msra.mxu0 %v421
        %454 = vmatpush.msra.mxu0 %v420
        %455 = vmatpush.msra.mxu0 %v419
        %456 = vmatpush.msra.mxu0 %v418
        %457 = vmatpush.msra.mxu0 %v417
        %458 = vmatpush.msra.mxu0 %v416
        %459 = vmatpush.msra.mxu0 %v415
        %460 = vmatpush.msra.mxu0 %v414
        %461 = vmatpush.msra.mxu0 %v413
        %462 = vmatpush.msra.mxu0 %v412
        %463 = vmatpush.msra.mxu0 %v411
        %464 = vmatmul.f32.gmra.mxu0 %v406
        %v465 = vpop.f32.mrf.mxu0
        %v466 = vadd.f32 %v446, %v465
        %467 = vmatmul.f32.gmra.mxu0 %v409
        %v468 = vpop.f32.mrf.mxu0
        %v469 = vadd.f32 %v446, %v468
        %470 = vdwg.mxu0
        %v471 = vmax.f32 %v466, 0.0
        %v472 = vmax.f32 %v469, 0.0
        %v474 = vperm.slane %v444, 0
        %476 = vmatpush.msra.mxu0 %v443
        %477 = vmatpush.msra.mxu0 %v442
        %478 = vmatpush.msra.mxu0 %v441
        %479 = vmatpush.msra.mxu0 %v440
        %480 = vmatpush.msra.mxu0 %v439
        %481 = vmatpush.msra.mxu0 %v438
        %482 = vmatpush.msra.mxu0 %v437
        %483 = vmatpush.msra.mxu0 %v436
        %484 = vmatpush.msra.mxu0 %v435
        %485 = vmatpush.msra.mxu0 %v434
        %486 = vmatpush.msra.mxu0 %v433
        %487 = vmatpush.msra.mxu0 %v432
        %488 = vmatpush.msra.mxu0 %v431
        %489 = vmatpush.msra.mxu0 %v430
        %490 = vmatpush.msra.mxu0 %v429
        %491 = vmatpush.msra.mxu0 %v428
        %492 = vmatmul.f32.gmra.mxu0 %v471
        %v493 = vpop.f32.mrf.mxu0
        %v494 = vadd.f32 %v474, %v493
        %495 = vmatmul.f32.gmra.mxu0 %v472
        %v496 = vpop.f32.mrf.mxu0
        %v497 = vadd.f32 %v474, %v496
        %498 = vdwg.mxu0
        %v499 = vadd.f32 %v494, %v406
        %v500 = vadd.f32 %v497, %v409
        %s501 = scalar_lea.vmem [#allocation2], 128
        %v502 = vld [vmem:[%s501] sm:$0xff]
        %v503 = vld [vmem:[%s501 + $0x8] sm:$0xff]
        %v504 = vld [vmem:[%s501 + $0x10] sm:$0xff]
        %v505 = vld [vmem:[%s501 + $0x18] sm:$0xff]
        %v506 = vld [vmem:[%s501 + $0x20] sm:$0xff]
        %v507 = vld [vmem:[%s501 + $0x28] sm:$0xff]
        %v508 = vld [vmem:[%s501 + $0x30] sm:$0xff]
        %v509 = vld [vmem:[%s501 + $0x38] sm:$0xff]
        %v510 = vld [vmem:[%s501 + $0x40] sm:$0xff]
        %v511 = vld [vmem:[%s501 + $0x48] sm:$0xff]
        %v512 = vld [vmem:[%s501 + $0x50] sm:$0xff]
        %v513 = vld [vmem:[%s501 + $0x58] sm:$0xff]
        %v514 = vld [vmem:[%s501 + $0x60] sm:$0xff]
        %v515 = vld [vmem:[%s501 + $0x68] sm:$0xff]
        %v516 = vld [vmem:[%s501 + $0x70] sm:$0xff]
        %v517 = vld [vmem:[%s501 + $0x78] sm:$0xff]
        %s518 = scalar_lea.vmem %s4, 1
        %v519 = vld [vmem:[%s518] sm:$0x1]
        %s520 = scalar_lea.vmem [#allocation4], 128
        %v521 = vld [vmem:[%s520] sm:$0xff]
        %v522 = vld [vmem:[%s520 + $0x8] sm:$0xff]
        %v523 = vld [vmem:[%s520 + $0x10] sm:$0xff]
        %v524 = vld [vmem:[%s520 + $0x18] sm:$0xff]
        %v525 = vld [vmem:[%s520 + $0x20] sm:$0xff]
        %v526 = vld [vmem:[%s520 + $0x28] sm:$0xff]
        %v527 = vld [vmem:[%s520 + $0x30] sm:$0xff]
        %v528 = vld [vmem:[%s520 + $0x38] sm:$0xff]
        %v529 = vld [vmem:[%s520 + $0x40] sm:$0xff]
        %v530 = vld [vmem:[%s520 + $0x48] sm:$0xff]
        %v531 = vld [vmem:[%s520 + $0x50] sm:$0xff]
        %v532 = vld [vmem:[%s520 + $0x58] sm:$0xff]
        %v533 = vld [vmem:[%s520 + $0x60] sm:$0xff]
        %v534 = vld [vmem:[%s520 + $0x68] sm:$0xff]
        %v535 = vld [vmem:[%s520 + $0x70] sm:$0xff]
        %v536 = vld [vmem:[%s520 + $0x78] sm:$0xff]
        %s537 = scalar_lea.vmem %s6, 1
        %v538 = vld [vmem:[%s537] sm:$0x1]
        %v540 = vperm.slane %v519, 0
        %542 = vmatpush.msra.mxu0 %v517
        %543 = vmatpush.msra.mxu0 %v516
        %544 = vmatpush.msra.mxu0 %v515
        %545 = vmatpush.msra.mxu0 %v514
        %546 = vmatpush.msra.mxu0 %v513
        %547 = vmatpush.msra.mxu0 %v512
        %548 = vmatpush.msra.mxu0 %v511
        %549 = vmatpush.msra.mxu0 %v510
        %550 = vmatpush.msra.mxu0 %v509
        %551 = vmatpush.msra.mxu0 %v508
        %552 = vmatpush.msra.mxu0 %v507
        %553 = vmatpush.msra.mxu0 %v506
        %554 = vmatpush.msra.mxu0 %v505
        %555 = vmatpush.msra.mxu0 %v504
        %556 = vmatpush.msra.mxu0 %v503
        %557 = vmatpush.msra.mxu0 %v502
        %558 = vmatmul.f32.gmra.mxu0 %v499
        %v559 = vpop.f32.mrf.mxu0
        %v560 = vadd.f32 %v540, %v559
        %561 = vmatmul.f32.gmra.mxu0 %v500
        %v562 = vpop.f32.mrf.mxu0
        %v563 = vadd.f32 %v540, %v562
        %564 = vdwg.mxu0
        %v565 = vmax.f32 %v560, 0.0
        %v566 = vmax.f32 %v563, 0.0
        %v568 = vperm.slane %v538, 0
        %570 = vmatpush.msra.mxu0 %v536
        %571 = vmatpush.msra.mxu0 %v535
        %572 = vmatpush.msra.mxu0 %v534
        %573 = vmatpush.msra.mxu0 %v533
        %574 = vmatpush.msra.mxu0 %v532
        %575 = vmatpush.msra.mxu0 %v531
        %576 = vmatpush.msra.mxu0 %v530
        %577 = vmatpush.msra.mxu0 %v529
        %578 = vmatpush.msra.mxu0 %v528
        %579 = vmatpush.msra.mxu0 %v527
        %580 = vmatpush.msra.mxu0 %v526
        %581 = vmatpush.msra.mxu0 %v525
        %582 = vmatpush.msra.mxu0 %v524
        %583 = vmatpush.msra.mxu0 %v523
        %584 = vmatpush.msra.mxu0 %v522
        %585 = vmatpush.msra.mxu0 %v521
        %586 = vmatmul.f32.gmra.mxu0 %v565
        %v587 = vpop.f32.mrf.mxu0
        %v588 = vadd.f32 %v568, %v587
        %589 = vmatmul.f32.gmra.mxu0 %v566
        %v590 = vpop.f32.mrf.mxu0
        %v591 = vadd.f32 %v568, %v590
        %592 = vdwg.mxu0
        %v593 = vadd.f32 %v588, %v499
        %v594 = vadd.f32 %v591, %v500
        %v595 = vld [vmem:[%s7] sm:$0xff]
        %v596 = vld [vmem:[%s7 + $0x8] sm:$0xff]
        %v597 = vld [vmem:[%s7 + $0x10] sm:$0xff]
        %v598 = vld [vmem:[%s7 + $0x18] sm:$0xff]
        %v599 = vld [vmem:[%s7 + $0x20] sm:$0xff]
        %v600 = vld [vmem:[%s7 + $0x28] sm:$0xff]
        %v601 = vld [vmem:[%s7 + $0x30] sm:$0xff]
        %v602 = vld [vmem:[%s7 + $0x38] sm:$0xff]
        %v603 = vld [vmem:[%s7 + $0x40] sm:$0xff]
        %v604 = vld [vmem:[%s7 + $0x48] sm:$0xff]
        %v605 = vld [vmem:[%s7 + $0x50] sm:$0xff]
        %v606 = vld [vmem:[%s7 + $0x58] sm:$0xff]
        %v607 = vld [vmem:[%s7 + $0x60] sm:$0xff]
        %v608 = vld [vmem:[%s7 + $0x68] sm:$0xff]
        %v609 = vld [vmem:[%s7 + $0x70] sm:$0xff]
        %v610 = vld [vmem:[%s7 + $0x78] sm:$0xff]
        %v611 = vld [vmem:[%s8] sm:$0x1]
        %v613 = vperm.slane %v611, 0
        %615 = vmatpush.msra.mxu0 %v610
        %616 = vmatpush.msra.mxu0 %v609
        %617 = vmatpush.msra.mxu0 %v608
        %618 = vmatpush.msra.mxu0 %v607
        %619 = vmatpush.msra.mxu0 %v606
        %620 = vmatpush.msra.mxu0 %v605
        %621 = vmatpush.msra.mxu0 %v604
        %622 = vmatpush.msra.mxu0 %v603
        %623 = vmatpush.msra.mxu0 %v602
        %624 = vmatpush.msra.mxu0 %v601
        %625 = vmatpush.msra.mxu0 %v600
        %626 = vmatpush.msra.mxu0 %v599
        %627 = vmatpush.msra.mxu0 %v598
        %628 = vmatpush.msra.mxu0 %v597
        %629 = vmatpush.msra.mxu0 %v596
        %630 = vmatpush.msra.mxu0 %v595
        %631 = vmatmul.f32.gmra.mxu0 %v593
        %v632 = vpop.f32.mrf.mxu0
        %v633 = vadd.f32 %v613, %v632
        %634 = vmatmul.f32.gmra.mxu0 %v594
        %v635 = vpop.f32.mrf.mxu0
        %v636 = vadd.f32 %v613, %v635
        %637 = vdwg.mxu0
        %vm638 = vcmask 97280
        %639 = vst.msk [vmem:[%s368] sm:$0xff] %vm638, %v633
        %640 = vst.msk [vmem:[%s368 + $0x8] sm:$0xff] %vm638, %v636
        %s641 = smul.u32 2, %s22
        %p642 = scmp.lt.s32.totalorder %s641, 3
        %s643 = scalar_select %p642, %s641, 3
        %s644 = smul.addr %s643, 8
        %s645 = scalar_lea.vmem %s9, %s644
        // Predicated region
        $region65: #{tpu_custom_call.1} parent=55 // pred_check
          %p646 = pneg %p234
        $region66: #{tpu_custom_call.1} parent=55 // pred_check_branch
          %648 = sbr.rel (%p646) target = $region68
        $region67: #{tpu_custom_call.1} parent=55 // pred_region
          %s649 = smul.u32 2, %s22
        $region68: #{tpu_custom_call.1} parent=55 // pred_fallthru
          _
      $region56: #{tpu_custom_call.1} parent=5 // pred_fallthru
        _
      %p650 = scmp.le.s32.totalorder 2, %s17
      // Predicated region
      $region69: #{tpu_custom_call.1} parent=5 // pred_check
        %p651 = pneg %p650
      $region70: #{tpu_custom_call.1} parent=5 // pred_check_branch
        %653 = sbr.rel (%p651) target = $region72
      $region71: #{tpu_custom_call.1} parent=5 // pred_region
        %s654 = ssub.s32 %s17, 2
        // Predicated region
        $region73: #{tpu_custom_call.1} parent=71 // pred_check
          %p655 = pneg %p240
        $region74: #{tpu_custom_call.1} parent=71 // pred_check_branch
          %657 = sbr.rel (%p655) target = $region76
        $region75: #{tpu_custom_call.1} parent=71 // pred_region
          %s658 = smul.u32 2, %s23
          %p659 = scmp.lt.s32.totalorder %s658, 3
          %s660 = scalar_select %p659, %s658, 3
          %s661 = smul.addr %s660, 8
          %s662 = scalar_lea.vmem %s9, %s661
        $region76: #{tpu_custom_call.1} parent=71 // pred_fallthru
          _
      $region72: #{tpu_custom_call.1} parent=5 // pred_fallthru
        _
    $region6: #{tpu_custom_call.1} parent=1 // loop_footer
      %s21 = sadd.s32 1, %s17
    $region7: #{tpu_custom_call.1} parent=1 // loop_footer_branch
      %16 = sbr.rel target = $region3
    $region8: #{tpu_custom_call.1} parent=1 // loop_exit
      _
    %663 = vsyncpa [#allocation3], 1
    %s664 = scalar_lea.sflag [#allocation3], 1
    %665 = vsyncpa %s664, 1
    %666 = vsyncpa [#allocation5], 1

</llo_original>
